<compile_context>
chip_gen: v5e
topology: v5e:2x2
jax: 0.10.0
libtpu: 0.0.40
codegen_flags: <defaults>
</compile_context>

<pallas_src>
import math

import jax
import jax.numpy as jnp
from jax import lax
from jax.experimental import pallas as pl
from jax.experimental.pallas import tpu as pltpu

# Model dims from the PyTorch spec.
D = 5     # input_dim
K = 3     # num_clusters
H = 10    # hidden width
O = 5     # output width
EPS = 1e-5

LANE = 128        # batch maps to lanes -> tiles are multiples of 128
MAX_TILE = 1024   # rows(=lanes) per grid step; keeps >=2 steps on v7x for big batches

# ---- packed parameter layout (one VMEM buffer, one DMA) --------------------
# Every parameter starts on an 8-aligned sublane offset; lane width 16 covers
# the widest row (2D = 10).
PC = 16
WQ_R, BQ_R, WS_R, W1_R, B1_R, W2_R, B2_R = 0, 8, 16, 32, 48, 64, 72
PR = 80


def pack_params(mu, var, pri, w1, b1, w2, b2):
    """Host-side: fold all parameter-derived math into a single (PR, PC) buffer."""
    var = jnp.abs(var) + EPS                       # (K, D)
    inv_var = 1.0 / var
    inv_std = lax.rsqrt(var)
    log_pi = jax.nn.log_softmax(pri, axis=-1)      # (1, K)

    # Gaussian soft-assignment in quadratic-expansion form:
    #   logp = wq @ [x*x ; x] + bq
    wq = jnp.concatenate([-0.5 * inv_var, mu * inv_var], axis=1)          # (K, 2D)
    bq = (log_pi[0]
          - 0.5 * jnp.sum(mu * mu * inv_var + jnp.log(2.0 * math.pi * var),
                          axis=-1)).reshape(K, 1)                          # (K, 1)
    # Weighted standardization:  xn = x * (inv_std^T @ r) - (mu*inv_std)^T @ r
    ws = jnp.concatenate([inv_std, mu * inv_std], axis=1).T                # (2D, K)

    p = jnp.zeros((PR, PC), jnp.float32)
    p = p.at[WQ_R:WQ_R + K, :2 * D].set(wq)
    p = p.at[BQ_R:BQ_R + K, :1].set(bq)
    p = p.at[WS_R:WS_R + 2 * D, :K].set(ws)
    p = p.at[W1_R:W1_R + H, :D].set(w1.T)          # (H, D)
    p = p.at[B1_R:B1_R + H, :1].set(b1.reshape(H, 1))
    p = p.at[W2_R:W2_R + O, :H].set(w2.T)          # (O, H)
    p = p.at[B2_R:B2_R + O, :1].set(b2.reshape(O, 1))
    return p


def mymodel_kernel(xt_ref, p_ref, ot_ref):
    xt = xt_ref[...]                                           # (D, BT)  batch in lanes

    # -- unpack pre-derived parameters: static slices of the resident tile --
    wq = p_ref[WQ_R:WQ_R + K, :2 * D]                          # (K, 2D)
    bq = p_ref[BQ_R:BQ_R + K, :1]                              # (K, 1)
    ws = p_ref[WS_R:WS_R + 2 * D, :K]                          # (2D, K)
    w1 = p_ref[W1_R:W1_R + H, :D]                              # (H, D)
    b1 = p_ref[B1_R:B1_R + H, :1]                              # (H, 1)
    w2 = p_ref[W2_R:W2_R + O, :H]                              # (O, H)
    b2 = p_ref[B2_R:B2_R + O, :1]                              # (O, 1)

    # -- UCBNorm Gaussian soft assignment: ONE MXU pass --
    feat = jnp.concatenate([xt * xt, xt], axis=0)              # (2D, BT)
    logp = jnp.dot(wq, feat, preferred_element_type=jnp.float32) + bq   # (K, BT)

    # responsibilities: stable softmax over clusters (sublane axis), exact divide
    m = jnp.max(logp, axis=0, keepdims=True)
    e = jnp.exp(logp - m)
    r = e / jnp.sum(e, axis=0, keepdims=True)                  # (K, BT)

    # -- weighted per-cluster standardization: ONE MXU pass --
    s = jnp.dot(ws, r, preferred_element_type=jnp.float32)     # (2D, BT)
    xn = xt * s[:D, :] - s[D:, :]                              # (D, BT)

    # -- hidden layer + ReLU --
    h = jnp.maximum(
        jnp.dot(w1, xn, preferred_element_type=jnp.float32) + b1, 0.0)   # (H, BT)

    # -- output layer + softmax over classes (sublane axis), exact divide --
    logits = jnp.dot(w2, h, preferred_element_type=jnp.float32) + b2     # (O, BT)
    lm = jnp.max(logits, axis=0, keepdims=True)
    le = jnp.exp(logits - lm)
    ot_ref[...] = le / jnp.sum(le, axis=0, keepdims=True)      # (O, BT) lane-dense store


def _round_up(n, m):
    return m * pl.cdiv(n, m)


@jax.jit
def mymodel_forward(x, packed_params):
    batch = x.shape[0]
    bt = min(MAX_TILE, _round_up(batch, LANE))     # lanes per grid step
    padded = _round_up(batch, bt)                  # multiple of bt (and of 128)

    # batch-in-lanes layout; zero-pad (padded columns stay finite end-to-end)
    xt = jnp.zeros((D, padded), jnp.float32).at[:, :batch].set(x.T)

    out_t = pl.pallas_call(
        mymodel_kernel,
        out_shape=jax.ShapeDtypeStruct((O, padded), jnp.float32),
        grid_spec=pltpu.PrefetchScalarGridSpec(
            num_scalar_prefetch=0,
            grid=(padded // bt,),
            in_specs=[
                pl.BlockSpec((D, bt), lambda i: (0, i)),     # batch tile (lane-dense)
                pl.BlockSpec((PR, PC), lambda i: (0, 0)),    # params resident
            ],
            out_specs=pl.BlockSpec((O, bt), lambda i: (0, i)),
        ),
        compiler_params=pltpu.CompilerParams(
            dimension_semantics=("parallel",)),   # shards batch steps over v7x's 2 TCs
    )(xt, packed_params)

    return out_t[:, :batch].T                      # (batch, O)


# ---- pure-JAX reference (original per-cluster formulation) ------------------
def reference_forward(x, mu, var, pri, w1, b1, w2, b2):
    var = jnp.abs(var) + EPS
    log_pi = jax.nn.log_softmax(pri, axis=-1)                            # (1, K)
    diff = x[:, None, :] - mu[None, :, :]                                # (B, K, D)
    log_pdf = -0.5 * jnp.sum(diff * diff / var[None, :, :]
                             + jnp.log(2.0 * math.pi * var)[None, :, :],
                             axis=-1)                                    # (B, K)
    r = jax.nn.softmax(log_pdf + log_pi, axis=-1)                        # (B, K)
    xn = jnp.sum(r[:, :, None] * diff * lax.rsqrt(var)[None, :, :], axis=1)
    h = jax.nn.relu(xn @ w1 + b1)
    return jax.nn.softmax(h @ w2 + b2, axis=-1)


def init_params(key):
    ks = jax.random.split(key, 7)
    mu = jax.random.normal(ks[0], (K, D), jnp.float32)                  # cluster means
    var = jnp.abs(jax.random.normal(ks[1], (K, D), jnp.float32)) + 0.5  # cluster vars
    pri = jax.random.normal(ks[2], (1, K), jnp.float32) * 0.1           # prior logits
    # nn.Linear(5, 10): weight stored transposed (5, 10); bias (1, 10)
    w1 = jax.random.normal(ks[3], (D, H), jnp.float32) * (1.0 / math.sqrt(D))
    b1 = jax.random.normal(ks[4], (1, H), jnp.float32) * 0.01
    # nn.Linear(10, 5): weight stored transposed (10, 5); bias (1, 5)
    w2 = jax.random.normal(ks[5], (H, O), jnp.float32) * (1.0 / math.sqrt(H))
    b2 = jax.random.normal(ks[6], (1, O), jnp.float32) * 0.01
    return mu, var, pri, w1, b1, w2, b2


if __name__ == "__main__":
    B = 8  # small demo batch
    key = jax.random.PRNGKey(0)
    k_x, k_p = jax.random.split(key)
    x = jax.random.normal(k_x, (B, D), jnp.float32)
    params = init_params(k_p)
    packed = pack_params(*params)

    out = mymodel_forward(x, packed)
    out = jax.block_until_ready(out)

    assert out.shape == (B, O), out.shape
    # softmax rows must sum to 1 (exact divides throughout)
    assert bool(jnp.allclose(jnp.sum(out, axis=1), 1.0, atol=1e-5))
    # cross-check the algebraic rewrite + host-side precompute against the
    # original per-cluster formulation
    ref = reference_forward(x, *params)
    assert bool(jnp.allclose(out, ref, atol=1e-4, rtol=1e-4))
    print("KERNEL_OK")
</pallas_src>

<mosaic_0001>
module attributes {stable_mosaic.version = 11 : i64} {
  func.func @mymodel_kernel(%arg0: i32, %arg1: memref<5x128xf32, #tpu.memory_space<vmem>>, %arg2: memref<80x16xf32, #tpu.memory_space<vmem>>, %arg3: memref<5x128xf32, #tpu.memory_space<vmem>>) attributes {dimension_semantics = [#tpu.dimension_semantics<parallel>], iteration_bounds = array<i64: 1>, scalar_prefetch = 0 : i64, scratch_operands = 0 : i64, tpu.core_type = #tpu.core_type<tc>, window_params = [{transform_indices = @transform_0, window_bounds = array<i64: 5, 128>}, {pipeline_mode = #tpu.pipeline_mode<synchronous>, transform_indices = @transform_1, window_bounds = array<i64: 80, 16>}, {transform_indices = @transform_2, window_bounds = array<i64: 5, 128>}]} {
    %c0 = arith.constant 0 : index
    %c0_0 = arith.constant 0 : index
    %0 = vector.load %arg1[%c0, %c0_0] : memref<5x128xf32, #tpu.memory_space<vmem>>, vector<5x128xf32>
    %c0_1 = arith.constant 0 : index
    %c0_2 = arith.constant 0 : index
    %1 = vector.load %arg2[%c0_1, %c0_2] : memref<80x16xf32, #tpu.memory_space<vmem>>, vector<3x10xf32>
    %c8 = arith.constant 8 : index
    %c0_3 = arith.constant 0 : index
    %2 = vector.load %arg2[%c8, %c0_3] : memref<80x16xf32, #tpu.memory_space<vmem>>, vector<3x1xf32>
    %c16 = arith.constant 16 : index
    %c0_4 = arith.constant 0 : index
    %3 = vector.load %arg2[%c16, %c0_4] : memref<80x16xf32, #tpu.memory_space<vmem>>, vector<10x3xf32>
    %c32 = arith.constant 32 : index
    %c0_5 = arith.constant 0 : index
    %4 = vector.load %arg2[%c32, %c0_5] : memref<80x16xf32, #tpu.memory_space<vmem>>, vector<10x5xf32>
    %c48 = arith.constant 48 : index
    %c0_6 = arith.constant 0 : index
    %5 = vector.load %arg2[%c48, %c0_6] : memref<80x16xf32, #tpu.memory_space<vmem>>, vector<10x1xf32>
    %c64 = arith.constant 64 : index
    %c0_7 = arith.constant 0 : index
    %6 = vector.load %arg2[%c64, %c0_7] : memref<80x16xf32, #tpu.memory_space<vmem>>, vector<5x10xf32>
    %c72 = arith.constant 72 : index
    %c0_8 = arith.constant 0 : index
    %7 = vector.load %arg2[%c72, %c0_8] : memref<80x16xf32, #tpu.memory_space<vmem>>, vector<5x1xf32>
    %8 = arith.mulf %0, %0 : vector<5x128xf32>
    %9 = tpu.concatenate %8, %0 in 0 : vector<5x128xf32>, vector<5x128xf32> -> vector<10x128xf32>
    %cst = arith.constant dense<0.000000e+00> : vector<3x128xf32>
    %10 = tpu.matmul %1, %9, %cst {dimension_numbers = #tpu.dot_dimension_numbers<[1], [0], [0], [1], [0, 0, 1, 1], [], []>} : vector<3x10xf32>, vector<10x128xf32>, vector<3x128xf32> -> vector<3x128xf32>
    %11 = vector.broadcast %2 : vector<3x1xf32> to vector<3x128xf32>
    %12 = arith.addf %10, %11 : vector<3x128xf32>
    %cst_9 = arith.constant dense<0xFF800000> : vector<128xf32>
    %13 = vector.multi_reduction <maximumf>, %12, %cst_9 [0] : vector<3x128xf32> to vector<128xf32>
    %14 = vector.shape_cast %13 : vector<128xf32> to vector<1x128xf32>
    %15 = vector.broadcast %14 : vector<1x128xf32> to vector<3x128xf32>
    %16 = arith.subf %12, %15 : vector<3x128xf32>
    %17 = math.exp %16 : vector<3x128xf32>
    %cst_10 = arith.constant dense<0.000000e+00> : vector<128xf32>
    %18 = vector.multi_reduction <add>, %17, %cst_10 [0] : vector<3x128xf32> to vector<128xf32>
    %19 = vector.shape_cast %18 : vector<128xf32> to vector<1x128xf32>
    %20 = vector.broadcast %19 : vector<1x128xf32> to vector<3x128xf32>
    %21 = arith.divf %17, %20 : vector<3x128xf32>
    %cst_11 = arith.constant dense<0.000000e+00> : vector<10x128xf32>
    %22 = tpu.matmul %3, %21, %cst_11 {dimension_numbers = #tpu.dot_dimension_numbers<[1], [0], [0], [1], [0, 0, 1, 1], [], []>} : vector<10x3xf32>, vector<3x128xf32>, vector<10x128xf32> -> vector<10x128xf32>
    %23 = vector.extract_strided_slice %22 {offsets = [0, 0], sizes = [5, 128], strides = [1, 1]} : vector<10x128xf32> to vector<5x128xf32>
    %24 = arith.mulf %0, %23 : vector<5x128xf32>
    %25 = vector.extract_strided_slice %22 {offsets = [5, 0], sizes = [5, 128], strides = [1, 1]} : vector<10x128xf32> to vector<5x128xf32>
    %26 = arith.subf %24, %25 : vector<5x128xf32>
    %cst_12 = arith.constant dense<0.000000e+00> : vector<10x128xf32>
    %27 = tpu.matmul %4, %26, %cst_12 {dimension_numbers = #tpu.dot_dimension_numbers<[1], [0], [0], [1], [0, 0, 1, 1], [], []>} : vector<10x5xf32>, vector<5x128xf32>, vector<10x128xf32> -> vector<10x128xf32>
    %28 = vector.broadcast %5 : vector<10x1xf32> to vector<10x128xf32>
    %29 = arith.addf %27, %28 : vector<10x128xf32>
    %cst_13 = arith.constant 0.000000e+00 : f32
    %30 = vector.broadcast %cst_13 : f32 to vector<10x128xf32>
    %31 = arith.maximumf %29, %30 : vector<10x128xf32>
    %cst_14 = arith.constant dense<0.000000e+00> : vector<5x128xf32>
    %32 = tpu.matmul %6, %31, %cst_14 {dimension_numbers = #tpu.dot_dimension_numbers<[1], [0], [0], [1], [0, 0, 1, 1], [], []>} : vector<5x10xf32>, vector<10x128xf32>, vector<5x128xf32> -> vector<5x128xf32>
    %33 = vector.broadcast %7 : vector<5x1xf32> to vector<5x128xf32>
    %34 = arith.addf %32, %33 : vector<5x128xf32>
    %cst_15 = arith.constant dense<0xFF800000> : vector<128xf32>
    %35 = vector.multi_reduction <maximumf>, %34, %cst_15 [0] : vector<5x128xf32> to vector<128xf32>
    %36 = vector.shape_cast %35 : vector<128xf32> to vector<1x128xf32>
    %37 = vector.broadcast %36 : vector<1x128xf32> to vector<5x128xf32>
    %38 = arith.subf %34, %37 : vector<5x128xf32>
    %39 = math.exp %38 : vector<5x128xf32>
    %cst_16 = arith.constant dense<0.000000e+00> : vector<128xf32>
    %40 = vector.multi_reduction <add>, %39, %cst_16 [0] : vector<5x128xf32> to vector<128xf32>
    %41 = vector.shape_cast %40 : vector<128xf32> to vector<1x128xf32>
    %42 = vector.broadcast %41 : vector<1x128xf32> to vector<5x128xf32>
    %43 = arith.divf %39, %42 : vector<5x128xf32>
    %c0_17 = arith.constant 0 : index
    %c0_18 = arith.constant 0 : index
    %44 = vector.load %arg3[%c0_17, %c0_18] : memref<5x128xf32, #tpu.memory_space<vmem>>, vector<5x128xf32>
    tpu.vector_store %arg3[%c0_17, %c0_18], %43 {strides = array<i32>} : memref<5x128xf32, #tpu.memory_space<vmem>>, vector<5x128xf32>,
    return
  }
  func.func @transform_0(%arg0: i32) -> (i32, i32) {
    %c0_i32 = arith.constant 0 : i32
    %c0_i32_0 = arith.constant 0 : i32
    return %c0_i32, %arg0 : i32, i32
  }
  func.func @transform_1(%arg0: i32) -> (i32, i32) {
    %c0_i32 = arith.constant 0 : i32
    %c0_i32_0 = arith.constant 0 : i32
    %c0_i32_1 = arith.constant 0 : i32
    return %c0_i32, %c0_i32_0 : i32, i32
  }
  func.func @transform_2(%arg0: i32) -> (i32, i32) {
    %c0_i32 = arith.constant 0 : i32
    %c0_i32_0 = arith.constant 0 : i32
    return %c0_i32, %arg0 : i32, i32
  }
}

</mosaic_0001>

<llo_original>
// kernel: mymodel_forward.1
$region0: #{mymodel_forward.1}
  #allocation0 [shape = 'u32[]', space=smem, size = 0x4, offset = 0x4, fixed_abs, tag = 'smem constant byte address 0x4 - core index']
  #allocation1 [shape = 'u32[72,128]{1,0:T(1,128)}', space=vmem, size = 0x9000, scoped, tag = 'internal scratch']
  %s0 = inlined_call_operand.vmem [shape: f32[5,128], index: 0, kind: input, shape index: {}]
  %s1 = inlined_call_operand.vmem [shape: f32[80,16], index: 1, kind: input, shape index: {}]
  %s2 = inlined_call_operand.vmem [shape: f32[5,128], index: 2, kind: output, shape index: {}]
  %s3 = sld [smem:[#allocation0]]
  $region18: #{mymodel_forward.1} parent=0
    _
  %s5 = ssub.s32 1, %s3
  %s6 = scalar_select 0, %s5, %s3
  // Predicated region
  $region2: #{mymodel_forward.1} parent=0 // pred_check
    _
  $region3: #{mymodel_forward.1} parent=0 // pred_check_branch
    %8 = sbr.rel (0) target = $region5
  $region4: #{mymodel_forward.1} parent=0 // pred_region
    _
  $region5: #{mymodel_forward.1} parent=0 // pred_fallthru
    _
  // Predicated region
  $region6: #{mymodel_forward.1} parent=0 // pred_check
    _
  $region7: #{mymodel_forward.1} parent=0 // pred_check_branch
    %10 = sbr.rel (0) target = $region9
  $region8: #{mymodel_forward.1} parent=0 // pred_region
    _
  $region9: #{mymodel_forward.1} parent=0 // pred_fallthru
    _
  %v11 = vld [vmem:[%s0] sm:$0x1f]
  %v12 = vld [vmem:[%s1] sm:$0x7]
  %v13 = vld [vmem:[%s1 + $0x8] sm:$0x7]
  %v14 = vld [vmem:[%s1 + $0x10] sm:$0xff]
  %v15 = vld [vmem:[%s1 + $0x18] sm:$0x3]
  %v16 = vld [vmem:[%s1 + $0x20] sm:$0xff]
  %v17 = vld [vmem:[%s1 + $0x28] sm:$0x3]
  %v18 = vld [vmem:[%s1 + $0x30] sm:$0xff]
  %v19 = vld [vmem:[%s1 + $0x38] sm:$0x3]
  %v20 = vld [vmem:[%s1 + $0x40] sm:$0x1f]
  %v21 = vld [vmem:[%s1 + $0x48] sm:$0x1f]
  %v22 = vmul.f32 %v11, %v11
  %v24 = vrot.slane %v11, 3
  %vm26 = vcmask 1044480
  %v27 = vsel %vm26, %v22, %v24
  %29 = vset.pattern.permute.xlu0 0
  %30 = vperm.xlu0 %29, %v13
  %v31 = vpop.permute.xlu0 %30
  %vm33 = vcmask 80896
  %v35 = vsel %vm33, %v12, 0
  %vm37 = vcmask 1041408
  %v38 = vsel %vm37, %v24, 0
  %40 = vmatpush.msra.mxu0 0.0
  %41 = vmatpush.msra.mxu0 0.0
  %42 = vmatpush.msra.mxu0 0.0
  %43 = vmatpush.msra.mxu0 0.0
  %44 = vmatpush.msra.mxu0 0.0
  %45 = vmatpush.msra.mxu0 0.0
  %46 = vmatpush.msra.mxu0 0.0
  %47 = vmatpush.msra.mxu0 0.0
  %48 = vmatpush.msra.mxu0 0.0
  %49 = vmatpush.msra.mxu0 0.0
  %50 = vmatpush.msra.mxu0 0.0
  %51 = vmatpush.msra.mxu0 0.0
  %52 = vmatpush.msra.mxu0 0.0
  %53 = vmatpush.msra.mxu0 0.0
  %54 = vmatpush.msra.mxu0 %v38
  %55 = vmatpush.msra.mxu0 %v27
  %56 = vmatmul.f32.gmra.mxu0 %v35
  %v57 = vpop.f32.mrf.mxu0
  %v58 = vadd.f32 %v31, %v57
  %59 = vdwg.mxu0
  %vm60 = vcmask 1042432
  %v61 = vsel %vm60, %v58, -inf
  %v62 = vrot.slane %v61, 4
  %v63 = vmax.f32 %v61, %v62
  %v64 = vrot.slane %v63, 2
  %v65 = vmax.f32 %v63, %v64
  %v66 = vrot.slane %v65, 1
  %v67 = vmax.f32 %v65, %v66
  %v68 = vsub.f32 %v58, %v67
  %v69 = vmul.f32 %v68, 1.442695
  %v70 = vpow.pop %v69
  %v71 = vsel %vm60, %v70, 0.0
  %v72 = vrot.slane %v71, 4
  %v73 = vadd.f32 %v71, %v72
  %v74 = vrot.slane %v73, 2
  %v75 = vadd.f32 %v73, %v74
  %v76 = vrot.slane %v75, 1
  %v77 = vadd.f32 %v75, %v76
  %v78 = vrcp.pop %v77
  %v79 = vmul.f32 %v77, %v78
  %v80 = vsub.f32 1.0, %v79
  %v81 = vmul.f32 %v78, %v80
  %v82 = vadd.f32 %v78, %v81
  %vm83 = vweird.f32 %v77
  %vm84 = vweird.f32 %v78
  %vm85 = vmor %vm83, %vm84
  %v86 = vsel %vm85, %v78, %v82
  %v87 = vand.u32 2147483647, %v77
  %vm88 = vcmp.eq.f32.partialorder %v87, 8.507059e+37
  %v89 = vand.u32 %v77, 2147483648
  %v90 = vor.u32 1.1754944e-38, %v89
  %v91 = vsel %vm88, %v90, %v86
  %v92 = vmul.f32 %v70, %v91
  %vm93 = vcmask 23552
  %v95 = vsel %vm93, %v14, 0
  %v98 = vsel %vm93, %v15, 0
  %v101 = vsel %vm60, %v92, 0
  %103 = vmatpush.msra.mxu0 0.0
  %104 = vmatpush.msra.mxu0 0.0
  %105 = vmatpush.msra.mxu0 0.0
  %106 = vmatpush.msra.mxu0 0.0
  %107 = vmatpush.msra.mxu0 0.0
  %108 = vmatpush.msra.mxu0 0.0
  %109 = vmatpush.msra.mxu0 0.0
  %110 = vmatpush.msra.mxu0 0.0
  %111 = vmatpush.msra.mxu0 0.0
  %112 = vmatpush.msra.mxu0 0.0
  %113 = vmatpush.msra.mxu0 0.0
  %114 = vmatpush.msra.mxu0 0.0
  %115 = vmatpush.msra.mxu0 0.0
  %116 = vmatpush.msra.mxu0 0.0
  %117 = vmatpush.msra.mxu0 0.0
  %118 = vmatpush.msra.mxu0 %v101
  %119 = vmatmul.f32.gmra.mxu0 %v95
  %v120 = vpop.f32.mrf.mxu0
  %v121 = vadd.f32 0.0, %v120
  %122 = vmatmul.f32.gmra.mxu0 %v98
  %v123 = vpop.f32.mrf.mxu0
  %v124 = vadd.f32 0.0, %v123
  %125 = vdwg.mxu0
  %v126 = vmul.f32 %v11, %v121
  %v129 = vrot.slane %v121, 5
  %v130 = vrot.slane %v124, 5
  %v131 = vsel %vm60, %v129, %v130
  %v133 = vsub.f32 %v126, %v131
  %135 = vset.pattern.permute.xlu0 0
  %136 = vperm.xlu0 %135, %v18
  %v137 = vpop.permute.xlu0 %136
  %140 = vset.pattern.permute.xlu0 0
  %141 = vperm.xlu0 %140, %v19
  %v142 = vpop.permute.xlu0 %141
  %vm144 = vcmask 39936
  %v146 = vsel %vm144, %v16, 0
  %v149 = vsel %vm144, %v17, 0
  %v152 = vsel %vm26, %v133, 0
  %154 = vmatpush.msra.mxu0 0.0
  %155 = vmatpush.msra.mxu0 0.0
  %156 = vmatpush.msra.mxu0 0.0
  %157 = vmatpush.msra.mxu0 0.0
  %158 = vmatpush.msra.mxu0 0.0
  %159 = vmatpush.msra.mxu0 0.0
  %160 = vmatpush.msra.mxu0 0.0
  %161 = vmatpush.msra.mxu0 0.0
  %162 = vmatpush.msra.mxu0 0.0
  %163 = vmatpush.msra.mxu0 0.0
  %164 = vmatpush.msra.mxu0 0.0
  %165 = vmatpush.msra.mxu0 0.0
  %166 = vmatpush.msra.mxu0 0.0
  %167 = vmatpush.msra.mxu0 0.0
  %168 = vmatpush.msra.mxu0 0.0
  %169 = vmatpush.msra.mxu0 %v152
  %170 = vmatmul.f32.gmra.mxu0 %v146
  %v171 = vpop.f32.mrf.mxu0
  %v172 = vadd.f32 %v137, %v171
  %173 = vmatmul.f32.gmra.mxu0 %v149
  %v174 = vpop.f32.mrf.mxu0
  %v175 = vadd.f32 %v142, %v174
  %176 = vdwg.mxu0
  %v177 = vmax.f32 %v172, 0.0
  %v178 = vmax.f32 %v175, 0.0
  %180 = vset.pattern.permute.xlu0 0
  %181 = vperm.xlu0 %180, %v21
  %v182 = vpop.permute.xlu0 %181
  %v185 = vsel %vm33, %v20, 0
  %v188 = vsel %vm37, %v178, 0
  %190 = vmatpush.msra.mxu0 0.0
  %191 = vmatpush.msra.mxu0 0.0
  %192 = vmatpush.msra.mxu0 0.0
  %193 = vmatpush.msra.mxu0 0.0
  %194 = vmatpush.msra.mxu0 0.0
  %195 = vmatpush.msra.mxu0 0.0
  %196 = vmatpush.msra.mxu0 0.0
  %197 = vmatpush.msra.mxu0 0.0
  %198 = vmatpush.msra.mxu0 0.0
  %199 = vmatpush.msra.mxu0 0.0
  %200 = vmatpush.msra.mxu0 0.0
  %201 = vmatpush.msra.mxu0 0.0
  %202 = vmatpush.msra.mxu0 0.0
  %203 = vmatpush.msra.mxu0 0.0
  %204 = vmatpush.msra.mxu0 %v188
  %205 = vmatpush.msra.mxu0 %v177
  %206 = vmatmul.f32.gmra.mxu0 %v185
  %v207 = vpop.f32.mrf.mxu0
  %v208 = vadd.f32 %v182, %v207
  %209 = vdwg.mxu0
  %v210 = vsel %vm26, %v208, -inf
  %v211 = vrot.slane %v210, 4
  %v212 = vmax.f32 %v210, %v211
  %v213 = vrot.slane %v212, 2
  %v214 = vmax.f32 %v212, %v213
  %v215 = vrot.slane %v214, 1
  %v216 = vmax.f32 %v214, %v215
  %v217 = vsub.f32 %v208, %v216
  %v218 = vmul.f32 %v217, 1.442695
  %v219 = vpow.pop %v218
  %v220 = vsel %vm26, %v219, 0.0
  %v221 = vrot.slane %v220, 4
  %v222 = vadd.f32 %v220, %v221
  %v223 = vrot.slane %v222, 2
  %v224 = vadd.f32 %v222, %v223
  %v225 = vrot.slane %v224, 1
  %v226 = vadd.f32 %v224, %v225
  %v227 = vrcp.pop %v226
  %v228 = vmul.f32 %v226, %v227
  %v229 = vsub.f32 1.0, %v228
  %v230 = vmul.f32 %v227, %v229
  %v231 = vadd.f32 %v227, %v230
  %vm232 = vweird.f32 %v226
  %vm233 = vweird.f32 %v227
  %vm234 = vmor %vm232, %vm233
  %v235 = vsel %vm234, %v227, %v231
  %v236 = vand.u32 2147483647, %v226
  %vm237 = vcmp.eq.f32.partialorder %v236, 8.507059e+37
  %v238 = vand.u32 %v226, 2147483648
  %v239 = vor.u32 1.1754944e-38, %v238
  %v240 = vsel %vm237, %v239, %v235
  %v241 = vmul.f32 %v219, %v240
  %242 = vst [vmem:[%s2] sm:$0x1f] %v241
  // Predicated region
  $region10: #{mymodel_forward.1} parent=0 // pred_check
    _
  $region11: #{mymodel_forward.1} parent=0 // pred_check_branch
    %244 = sbr.rel (0) target = $region13
  $region12: #{mymodel_forward.1} parent=0 // pred_region
    _
  $region13: #{mymodel_forward.1} parent=0 // pred_fallthru
    _
  // Predicated region
  $region14: #{mymodel_forward.1} parent=0 // pred_check
    _
  $region15: #{mymodel_forward.1} parent=0 // pred_check_branch
    %246 = sbr.rel (0) target = $region17
  $region16: #{mymodel_forward.1} parent=0 // pred_region
    _
  $region17: #{mymodel_forward.1} parent=0 // pred_fallthru
    _

</llo_original>
